<compile_context>
chip_gen: v5e
topology: v5e:2x2
jax: 0.10.0
libtpu: 0.0.40
codegen_flags: <defaults>
</compile_context>

<pallas_src>
import numpy as np
import jax
import jax.numpy as jnp
from jax.experimental import pallas as pl
from jax.experimental.pallas import tpu as pltpu


# ----------------------------------------------------------------------------
# Fused kernel: whole forward for the whole batch = two 2-D MXU matmuls.
#   o = A_h_bd @ (X @ BY) + D
# Shapes for N=2, H=W=16, Cout=32:
#   x_ref    : (N*H,  W*Cin)      = (32, 48)     bf16   interior rows, flattened
#   by_ref   : (W*Cin, C*Wout)    = (48, 1280)   bf16   fused conv (x) width-resize
#   ahbd_ref : (N*Hout, N*H)      = (80, 32)     bf16   block-diag height resize
#   d_ref    : (N*Hout, C*Wout)   = (80, 1280)   f32    bias / pad-ring response
#   o_ref    : (N*Hout, C*Wout)   = (80, 1280)   f32    lane-dense (1280 % 128 == 0)
# ----------------------------------------------------------------------------
def _fused_forward_kernel(x_ref, by_ref, ahbd_ref, d_ref, o_ref):
    # Conv + width-direction resize, f32 accumulate on the MXU.
    t = jnp.dot(x_ref[...], by_ref[...], preferred_element_type=jnp.float32)
    # Height-direction resize (block-diagonal over batch) + constant term.
    o_ref[...] = (
        jnp.dot(ahbd_ref[...], t.astype(jnp.bfloat16),
                preferred_element_type=jnp.float32)
        + d_ref[...]
    )


def _bilinear_matrix_np(n_in, scale):
    """Interpolation matrix matching torch bilinear upsample, align_corners=False."""
    n_out = n_in * scale
    out_idx = np.arange(n_out, dtype=np.float64)
    src = (out_idx + 0.5) / scale - 0.5
    src = np.clip(src, 0.0, n_in - 1)
    lo = np.floor(src)
    w_hi = src - lo
    lo_i = lo.astype(np.int64)
    hi_i = np.minimum(lo_i + 1, n_in - 1)
    a = np.zeros((n_out, n_in), np.float64)
    rows = np.arange(n_out)
    np.add.at(a, (rows, lo_i), 1.0 - w_hi)
    np.add.at(a, (rows, hi_i), w_hi)
    return a


def precompute_constants(params, n, cin, h, w):
    """One-time (numpy) construction of all parameter-derived kernel operands."""
    w1 = np.asarray(params["w1"], np.float64)
    b1 = np.asarray(params["b1"], np.float64)
    w2 = np.asarray(params["w2"], np.float64)
    b2 = np.asarray(params["b2"], np.float64)
    cout = w2.shape[1]
    h2, w2s = h + 4, w + 4            # spatial after the two pad=1 1x1 convs
    hout, wout = 2 * h2, 2 * w2s      # after 2x bilinear resize

    w12 = w1 @ w2                     # composed 1x1 convs (Cin, Cout)
    b12 = b1 @ w2 + b2                # (Cout,)
    ah = _bilinear_matrix_np(h2, 2)   # (Hout, H2)
    aw = _bilinear_matrix_np(w2s, 2)  # (Wout, W2)

    # Width-resize folded into the conv weights, interior width rows only:
    #   by[w*cin + i, c*wout + wo] = w12[i, c] * aw[wo, w + 2]
    by_int = np.einsum("ic,ow->wico", w12, aw[:, 2:2 + w]).reshape(
        w * cin, cout * wout)

    # Constant response of the bias / pad rings:
    #   ring image = b2 on the outer ring (conv2's own zero-padding), b12 elsewhere.
    rr = np.arange(h2)[:, None]
    ss = np.arange(w2s)[None, :]
    outer = (rr == 0) | (rr == h2 - 1) | (ss == 0) | (ss == w2s - 1)
    ring = np.where(outer[:, :, None], b2[None, None, :], b12[None, None, :])
    d = np.einsum("oh,hwc,kw->ock", ah, ring, aw).reshape(hout, cout * wout)

    # Interior columns of A_h, laid out block-diagonally over the batch.
    ah_int = ah[:, 2:2 + h]                       # (Hout, H)
    ah_bd = np.zeros((n * hout, n * h), np.float64)
    for b in range(n):
        ah_bd[b * hout:(b + 1) * hout, b * h:(b + 1) * h] = ah_int

    return {
        "by": jnp.asarray(by_int, jnp.bfloat16),       # (W*Cin, C*Wout)
        "ah_bd": jnp.asarray(ah_bd, jnp.bfloat16),     # (N*Hout, N*H) exact in bf16
        "d": jnp.asarray(np.tile(d, (n, 1)), jnp.float32),  # (N*Hout, C*Wout)
    }


def model_forward(x_nchw, consts):
    by, ah_bd, d = consts["by"], consts["ah_bd"], consts["d"]
    n, cin, h, w = x_nchw.shape
    hout, wout = 2 * (h + 4), 2 * (w + 4)
    cwout = by.shape[1]
    cout = cwout // wout

    # NCHW -> stacked interior rows (N*H, W*Cin) in bf16.  No jnp.pad: the zero
    # border contributes nothing to X @ BY; its constant response lives in D.
    x_rows = jnp.transpose(x_nchw, (0, 2, 3, 1)).reshape(n * h, w * cin)
    x_rows = x_rows.astype(jnp.bfloat16)

    flops = 2 * ((n * h) * (w * cin) * cwout + (n * hout) * (n * h) * cwout)
    bytes_accessed = (x_rows.size * 2 + by.size * 2 + ah_bd.size * 2
                      + d.size * 4 + (n * hout) * cwout * 4)

    out = pl.pallas_call(
        _fused_forward_kernel,
        out_shape=jax.ShapeDtypeStruct((n * hout, cwout), jnp.float32),
        in_specs=[pl.BlockSpec(memory_space=pltpu.MemorySpace.VMEM)] * 4,
        out_specs=pl.BlockSpec(memory_space=pltpu.MemorySpace.VMEM),
        cost_estimate=pl.CostEstimate(flops=flops, transcendentals=0,
                                      bytes_accessed=bytes_accessed),
    )(x_rows, by, ah_bd, d)

    # Lane-dense kernel output (N*Hout, Cout*Wout).  The NCHW conversion below only
    # mirrors the PyTorch contract; drop it if the consumer accepts this layout.
    c1 = jnp.transpose(out.reshape(n, hout, cout, wout), (0, 2, 1, 3))

    # cat/slice/cat: c2 would hold 64 channels, so [:, 100:200] is empty and
    # cat([c1, empty], dim=1) == c1  -> return c1 directly (see TODOs above).
    return c1


def _reference_forward(x_nchw, params):
    """Pure-jnp f32 structural reference: unfused convs + explicit separable resize."""
    w1 = jnp.asarray(params["w1"], jnp.float32)
    b1 = jnp.asarray(params["b1"], jnp.float32)
    w2 = jnp.asarray(params["w2"], jnp.float32)
    b2 = jnp.asarray(params["b2"], jnp.float32)
    x = jnp.transpose(x_nchw, (0, 2, 3, 1))
    x_p = jnp.pad(x, ((0, 0), (1, 1), (1, 1), (0, 0)))
    out1 = jnp.einsum("nhwi,io->nhwo", x_p, w1) + b1
    out1_p = jnp.pad(out1, ((0, 0), (1, 1), (1, 1), (0, 0)))
    out2 = jnp.einsum("nhwi,io->nhwo", out1_p, w2) + b2
    h2, w2s = out2.shape[1], out2.shape[2]
    ah = jnp.asarray(_bilinear_matrix_np(h2, 2), jnp.float32)
    aw = jnp.asarray(_bilinear_matrix_np(w2s, 2), jnp.float32)
    return jnp.einsum("oh,nhwc,kw->ncok", ah, out2, aw)   # NCHW


if __name__ == "__main__":
    key = jax.random.PRNGKey(0)
    k1, k2, k3, k4, kx = jax.random.split(key, 5)

    # Conv2d(3,16,1) / Conv2d(16,32,1) weights stored as (Cin, Cout) matrices.
    # (PyTorch stores (Cout, Cin, 1, 1); real checkpoint weights need
    #  .squeeze(-1).squeeze(-1).T before use.)
    params = {
        "w1": jax.random.normal(k1, (3, 16), jnp.float32) * 0.1,
        "b1": jax.random.normal(k2, (16,), jnp.float32) * 0.1,
        "w2": jax.random.normal(k3, (16, 32), jnp.float32) * 0.1,
        "b2": jax.random.normal(k4, (32,), jnp.float32) * 0.1,
    }

    # Small NCHW input consistent with the module (3 input channels).
    N, CIN, H, W = 2, 3, 16, 16
    x1 = jax.random.normal(kx, (N, CIN, H, W), jnp.float32)

    # One-time constant precomputation (perf-review item #1).
    consts = precompute_constants(params, N, CIN, H, W)

    forward = jax.jit(model_forward)
    out = jax.block_until_ready(forward(x1, consts))
    ref = _reference_forward(x1, params)

    # conv1 -> 18x18, conv2 -> 20x20, 2x upsample -> (N, 32, 40, 40)
    assert out.shape == (N, 32, 2 * (H + 4), 2 * (W + 4)), out.shape
    assert bool(jnp.all(jnp.isfinite(out)))
    # bf16 MXU operands vs all-f32 reference -> 1e-2 tolerance is intentional.
    assert bool(jnp.allclose(out, ref, rtol=1e-2, atol=1e-2)), float(
        jnp.max(jnp.abs(out - ref))
    )
    print("KERNEL_OK")
</pallas_src>

<mosaic_0001>
module attributes {stable_mosaic.version = 11 : i64} {
  func.func @_fused_forward_kernel(%arg0: memref<32x48xbf16, #tpu.memory_space<vmem>>, %arg1: memref<48x1280xbf16, #tpu.memory_space<vmem>>, %arg2: memref<80x32xbf16, #tpu.memory_space<vmem>>, %arg3: memref<80x1280xf32, #tpu.memory_space<vmem>>, %arg4: memref<80x1280xf32, #tpu.memory_space<vmem>>) attributes {dimension_semantics = [], scalar_prefetch = 0 : i64, scratch_operands = 0 : i64, tpu.core_type = #tpu.core_type<tc>} {
    %c0 = arith.constant 0 : index
    %c0_0 = arith.constant 0 : index
    %0 = vector.load %arg0[%c0, %c0_0] : memref<32x48xbf16, #tpu.memory_space<vmem>>, vector<32x48xbf16>
    %c0_1 = arith.constant 0 : index
    %c0_2 = arith.constant 0 : index
    %1 = vector.load %arg1[%c0_1, %c0_2] : memref<48x1280xbf16, #tpu.memory_space<vmem>>, vector<48x1280xbf16>
    %cst = arith.constant dense<0.000000e+00> : vector<32x1280xf32>
    %2 = tpu.matmul %0, %1, %cst {dimension_numbers = #tpu.dot_dimension_numbers<[1], [0], [0], [1], [0, 0, 1, 1], [], []>} : vector<32x48xbf16>, vector<48x1280xbf16>, vector<32x1280xf32> -> vector<32x1280xf32>
    %c0_3 = arith.constant 0 : index
    %c0_4 = arith.constant 0 : index
    %3 = vector.load %arg2[%c0_3, %c0_4] : memref<80x32xbf16, #tpu.memory_space<vmem>>, vector<80x32xbf16>
    %4 = arith.truncf %2 : vector<32x1280xf32> to vector<32x1280xbf16>
    %cst_5 = arith.constant dense<0.000000e+00> : vector<80x1280xf32>
    %5 = tpu.matmul %3, %4, %cst_5 {dimension_numbers = #tpu.dot_dimension_numbers<[1], [0], [0], [1], [0, 0, 1, 1], [], []>} : vector<80x32xbf16>, vector<32x1280xbf16>, vector<80x1280xf32> -> vector<80x1280xf32>
    %c0_6 = arith.constant 0 : index
    %c0_7 = arith.constant 0 : index
    %6 = vector.load %arg3[%c0_6, %c0_7] : memref<80x1280xf32, #tpu.memory_space<vmem>>, vector<80x1280xf32>
    %7 = arith.addf %5, %6 : vector<80x1280xf32>
    %c0_8 = arith.constant 0 : index
    %c0_9 = arith.constant 0 : index
    %8 = vector.load %arg4[%c0_8, %c0_9] : memref<80x1280xf32, #tpu.memory_space<vmem>>, vector<80x1280xf32>
    tpu.vector_store %arg4[%c0_8, %c0_9], %7 {strides = array<i32>} : memref<80x1280xf32, #tpu.memory_space<vmem>>, vector<80x1280xf32>,
    return
  }
}

</mosaic_0001>

<llo_original>
// kernel: model_forward.1
$region0: #{model_forward.1}
  #allocation0 [shape = 'u32[]', space=smem, size = 0x4, offset = 0x4, fixed_abs, tag = 'smem constant byte address 0x4 - core index']
  #allocation1 [shape = 'u32[72,128]{1,0:T(1,128)}', space=vmem, size = 0x9000, scoped, tag = 'internal scratch']
  %s0 = inlined_call_operand.vmem [shape: bf16[32,48], index: 0, kind: input, shape index: {}]
  %s1 = inlined_call_operand.hbm [shape: bf16[48,1280], index: 1, kind: input, shape index: {}]
  %s2 = inlined_call_operand.vmem [shape: bf16[80,32], index: 2, kind: input, shape index: {}]
  %s3 = inlined_call_operand.hbm [shape: f32[80,1280], index: 3, kind: input, shape index: {}]
  %s4 = inlined_call_operand.vmem [shape: f32[80,1280], index: 4, kind: output, shape index: {}]
  %s5 = sld [smem:[#allocation0]]
  $region34: #{model_forward.1} parent=0
    _
  %s7 = ssub.s32 1, %s5
  %s8 = scalar_select 0, %s7, %s5
  $region1: #{model_forward.1} parent=0
    #allocation2 [shape = 'u8[122880]{0}', space=vmem, size = 0x1e000, scoped, tag = 'input window, operand 1, single buffered']
    #allocation3 [shape = 's32[1]{0}', space=sflag, size = 0x4, scoped, tag = 'scoped memory for model_forward.1']
    #allocation4 [shape = 'u8[409600]{0}', space=vmem, size = 0x64000, scoped, tag = 'input window, operand 3, single buffered']
    #allocation5 [shape = 's32[1]{0}', space=sflag, size = 0x4, scoped, tag = 'scoped memory for model_forward.1']
    %9 = vsyncpa [#allocation3], 0
    %10 = vsyncpa [#allocation5], 0
    // Predicated region
    $region2: #{model_forward.1} parent=1 // pred_check
      _
    $region3: #{model_forward.1} parent=1 // pred_check_branch
      %12 = sbr.rel (0) target = $region5
    $region4: #{model_forward.1} parent=1 // pred_region
      _
    $region5: #{model_forward.1} parent=1 // pred_fallthru
      _
    // Predicated region
    $region6: #{model_forward.1} parent=1 // pred_check
      _
    $region7: #{model_forward.1} parent=1 // pred_check_branch
      %14 = sbr.rel (0) target = $region9
    $region8: #{model_forward.1} parent=1 // pred_region
      %16 = vsyncadd [#allocation3], 0
      %s17 = sshll.u32 %s1, 4
      %s18 = int_to_ptr.hbm [resolvable:$true] %s17
      %s19 = sshll.u32 [#allocation2], 4
      %s20 = int_to_ptr.vmem [resolvable:$true] %s19
      %25 = dma.hbm_to_vmem [thread:$0]  %s18, 3840, %s20, [#allocation3], 640, 640, 40
    $region9: #{model_forward.1} parent=1 // pred_fallthru
      _
    // Predicated region
    $region10: #{model_forward.1} parent=1 // pred_check
      _
    $region11: #{model_forward.1} parent=1 // pred_check_branch
      %27 = sbr.rel (0) target = $region13
    $region12: #{model_forward.1} parent=1 // pred_region
      _
    $region13: #{model_forward.1} parent=1 // pred_fallthru
      _
    // Predicated region
    $region14: #{model_forward.1} parent=1 // pred_check
      _
    $region15: #{model_forward.1} parent=1 // pred_check_branch
      %29 = sbr.rel (0) target = $region17
    $region16: #{model_forward.1} parent=1 // pred_region
      %31 = vsyncadd [#allocation5], 0
      %s32 = sshll.u32 %s3, 4
      %s33 = int_to_ptr.hbm [resolvable:$true] %s32
      %s34 = sshll.u32 [#allocation4], 4
      %s35 = int_to_ptr.vmem [resolvable:$true] %s34
      %40 = dma.hbm_to_vmem [thread:$0]  %s33, 12800, %s35, [#allocation5], 1280, 1280, 80
    $region17: #{model_forward.1} parent=1 // pred_fallthru
      _
    // Predicated region
    $region18: #{model_forward.1} parent=1 // pred_check
      _
    $region19: #{model_forward.1} parent=1 // pred_check_branch
      %42 = sbr.rel (0) target = $region21
    $region20: #{model_forward.1} parent=1 // pred_region
      %44 = dma.done [#allocation3], 3840
    $region21: #{model_forward.1} parent=1 // pred_fallthru
      _
    // Predicated region
    $region22: #{model_forward.1} parent=1 // pred_check
      _
    $region23: #{model_forward.1} parent=1 // pred_check_branch
      %46 = sbr.rel (0) target = $region25
    $region24: #{model_forward.1} parent=1 // pred_region
      %48 = dma.done [#allocation5], 12800
    $region25: #{model_forward.1} parent=1 // pred_fallthru
      _
    %v50 = vld [vmem:[%s0] sm:$0xf]
    %v51 = vld [vmem:[%s0 + $0x4] sm:$0xf]
    %v52 = vld [vmem:[%s0 + $0x8] sm:$0xf]
    %v53 = vld [vmem:[%s0 + $0xc] sm:$0xf]
    %v54 = vld [vmem:[#allocation2] sm:$0xff]
    %v55 = vld [vmem:[#allocation2 + $0x8] sm:$0xff]
    %v56 = vld [vmem:[#allocation2 + $0x10] sm:$0xff]
    %v57 = vld [vmem:[#allocation2 + $0x18] sm:$0xff]
    %v58 = vld [vmem:[#allocation2 + $0x20] sm:$0xff]
    %v59 = vld [vmem:[#allocation2 + $0x28] sm:$0xff]
    %v60 = vld [vmem:[#allocation2 + $0x30] sm:$0xff]
    %v61 = vld [vmem:[#allocation2 + $0x38] sm:$0xff]
    %v62 = vld [vmem:[#allocation2 + $0x40] sm:$0xff]
    %v63 = vld [vmem:[#allocation2 + $0x48] sm:$0xff]
    %v64 = vld [vmem:[#allocation2 + $0x50] sm:$0xff]
    %v65 = vld [vmem:[#allocation2 + $0x58] sm:$0xff]
    %v66 = vld [vmem:[#allocation2 + $0x60] sm:$0xff]
    %v67 = vld [vmem:[#allocation2 + $0x68] sm:$0xff]
    %v68 = vld [vmem:[#allocation2 + $0x70] sm:$0xff]
    %v69 = vld [vmem:[#allocation2 + $0x78] sm:$0xff]
    %v70 = vld [vmem:[#allocation2 + $0x80] sm:$0xff]
    %v71 = vld [vmem:[#allocation2 + $0x88] sm:$0xff]
    %v72 = vld [vmem:[#allocation2 + $0x90] sm:$0xff]
    %v73 = vld [vmem:[#allocation2 + $0x98] sm:$0xff]
    %v74 = vld [vmem:[#allocation2 + $0xa0] sm:$0xff]
    %v75 = vld [vmem:[#allocation2 + $0xa8] sm:$0xff]
    %v76 = vld [vmem:[#allocation2 + $0xb0] sm:$0xff]
    %v77 = vld [vmem:[#allocation2 + $0xb8] sm:$0xff]
    %v78 = vld [vmem:[#allocation2 + $0xc0] sm:$0xff]
    %v79 = vld [vmem:[#allocation2 + $0xc8] sm:$0xff]
    %v80 = vld [vmem:[#allocation2 + $0xd0] sm:$0xff]
    %v81 = vld [vmem:[#allocation2 + $0xd8] sm:$0xff]
    %v82 = vld [vmem:[#allocation2 + $0xe0] sm:$0xff]
    %v83 = vld [vmem:[#allocation2 + $0xe8] sm:$0xff]
    %v88 = vunpack.c.l.b16 %v50
    %v89 = vunpack.c.l.b16 %v51
    %v90 = vunpack.c.l.b16 %v52
    %v91 = vunpack.c.l.b16 %v53
    %v92 = vpack.c.b16 %v89, %v88
    %v93 = vpack.c.b16 %v91, %v90
    %v124 = vunpack.c.l.b16 %v54
    %v125 = vunpack.c.h.b16 %v54
    %v126 = vunpack.c.l.b16 %v55
    %v127 = vunpack.c.h.b16 %v55
    %v128 = vunpack.c.l.b16 %v56
    %v129 = vunpack.c.h.b16 %v56
    %v130 = vunpack.c.l.b16 %v57
    %v131 = vunpack.c.h.b16 %v57
    %v132 = vunpack.c.l.b16 %v58
    %v133 = vunpack.c.h.b16 %v58
    %v134 = vunpack.c.l.b16 %v59
    %v135 = vunpack.c.h.b16 %v59
    %v136 = vunpack.c.l.b16 %v60
    %v137 = vunpack.c.h.b16 %v60
    %v138 = vunpack.c.l.b16 %v61
    %v139 = vunpack.c.h.b16 %v61
    %v140 = vunpack.c.l.b16 %v62
    %v141 = vunpack.c.h.b16 %v62
    %v142 = vunpack.c.l.b16 %v63
    %v143 = vunpack.c.h.b16 %v63
    %v144 = vunpack.c.l.b16 %v64
    %v145 = vunpack.c.h.b16 %v64
    %v146 = vunpack.c.l.b16 %v65
    %v147 = vunpack.c.h.b16 %v65
    %v148 = vunpack.c.l.b16 %v66
    %v149 = vunpack.c.h.b16 %v66
    %v150 = vunpack.c.l.b16 %v67
    %v151 = vunpack.c.h.b16 %v67
    %v152 = vunpack.c.l.b16 %v68
    %v153 = vunpack.c.h.b16 %v68
    %v154 = vunpack.c.l.b16 %v69
    %v155 = vunpack.c.h.b16 %v69
    %v156 = vunpack.c.l.b16 %v70
    %v157 = vunpack.c.h.b16 %v70
    %v158 = vunpack.c.l.b16 %v71
    %v159 = vunpack.c.h.b16 %v71
    %v160 = vunpack.c.l.b16 %v72
    %v161 = vunpack.c.h.b16 %v72
    %v162 = vunpack.c.l.b16 %v73
    %v163 = vunpack.c.h.b16 %v73
    %v164 = vunpack.c.l.b16 %v74
    %v165 = vunpack.c.h.b16 %v74
    %v166 = vunpack.c.l.b16 %v75
    %v167 = vunpack.c.h.b16 %v75
    %v168 = vunpack.c.l.b16 %v76
    %v169 = vunpack.c.h.b16 %v76
    %v170 = vunpack.c.l.b16 %v77
    %v171 = vunpack.c.h.b16 %v77
    %v172 = vunpack.c.l.b16 %v78
    %v173 = vunpack.c.h.b16 %v78
    %v174 = vunpack.c.l.b16 %v79
    %v175 = vunpack.c.h.b16 %v79
    %v176 = vunpack.c.l.b16 %v80
    %v177 = vunpack.c.h.b16 %v80
    %v178 = vunpack.c.l.b16 %v81
    %v179 = vunpack.c.h.b16 %v81
    %v180 = vunpack.c.l.b16 %v82
    %v181 = vunpack.c.h.b16 %v82
    %v182 = vunpack.c.l.b16 %v83
    %v183 = vunpack.c.h.b16 %v83
    %v184 = vpack.c.b16 %v134, %v124
    %v185 = vpack.c.b16 %v135, %v125
    %v186 = vpack.c.b16 %v136, %v126
    %v187 = vpack.c.b16 %v137, %v127
    %v188 = vpack.c.b16 %v138, %v128
    %v189 = vpack.c.b16 %v139, %v129
    %v190 = vpack.c.b16 %v140, %v130
    %v191 = vpack.c.b16 %v141, %v131
    %v192 = vpack.c.b16 %v142, %v132
    %v193 = vpack.c.b16 %v143, %v133
    %v194 = vpack.c.b16 %v154, %v144
    %v195 = vpack.c.b16 %v155, %v145
    %v196 = vpack.c.b16 %v156, %v146
    %v197 = vpack.c.b16 %v157, %v147
    %v198 = vpack.c.b16 %v158, %v148
    %v199 = vpack.c.b16 %v159, %v149
    %v200 = vpack.c.b16 %v160, %v150
    %v201 = vpack.c.b16 %v161, %v151
    %v202 = vpack.c.b16 %v162, %v152
    %v203 = vpack.c.b16 %v163, %v153
    %v204 = vpack.c.b16 %v174, %v164
    %v205 = vpack.c.b16 %v175, %v165
    %v206 = vpack.c.b16 %v176, %v166
    %v207 = vpack.c.b16 %v177, %v167
    %v208 = vpack.c.b16 %v178, %v168
    %v209 = vpack.c.b16 %v179, %v169
    %v210 = vpack.c.b16 %v180, %v170
    %v211 = vpack.c.b16 %v181, %v171
    %v212 = vpack.c.b16 %v182, %v172
    %v213 = vpack.c.b16 %v183, %v173
    %vm244 = vcmask 392192
    %v246 = vsel %vm244, %v92, 0
    %v249 = vsel %vm244, %v93, 0
    %251 = vmatpush.bf16.msra.mxu0 0
    %252 = vmatpush.bf16.msra.mxu0 0
    %253 = vmatpush.bf16.msra.mxu0 0
    %254 = vmatpush.bf16.msra.mxu0 0
    %255 = vmatpush.bf16.msra.mxu0 0
    %256 = vmatpush.bf16.msra.mxu0 %v204
    %257 = vmatpush.bf16.msra.mxu0 %v194
    %258 = vmatpush.bf16.msra.mxu0 %v184
    %259 = vmatmul.bf16.gmra.mxu0 %v246
    %v260 = vpop.f32.mrf.mxu0
    %v261 = vadd.f32 0.0, %v260
    %v262 = vpop.f32.mrf.mxu0
    %v263 = vadd.f32 0.0, %v262
    %264 = vmatmul.bf16.gmra.mxu0 %v249
    %v265 = vpop.f32.mrf.mxu0
    %v266 = vadd.f32 0.0, %v265
    %v267 = vpop.f32.mrf.mxu0
    %v268 = vadd.f32 0.0, %v267
    %269 = vdwg.mxu0
    %270 = vmatpush.bf16.msra.mxu0 0
    %271 = vmatpush.bf16.msra.mxu0 0
    %272 = vmatpush.bf16.msra.mxu0 0
    %273 = vmatpush.bf16.msra.mxu0 0
    %274 = vmatpush.bf16.msra.mxu0 0
    %275 = vmatpush.bf16.msra.mxu0 %v205
    %276 = vmatpush.bf16.msra.mxu0 %v195
    %277 = vmatpush.bf16.msra.mxu0 %v185
    %278 = vmatmul.bf16.gmra.mxu0 %v246
    %v279 = vpop.f32.mrf.mxu0
    %v280 = vadd.f32 0.0, %v279
    %v281 = vpop.f32.mrf.mxu0
    %v282 = vadd.f32 0.0, %v281
    %283 = vmatmul.bf16.gmra.mxu0 %v249
    %v284 = vpop.f32.mrf.mxu0
    %v285 = vadd.f32 0.0, %v284
    %v286 = vpop.f32.mrf.mxu0
    %v287 = vadd.f32 0.0, %v286
    %288 = vdwg.mxu0
    %289 = vmatpush.bf16.msra.mxu0 0
    %290 = vmatpush.bf16.msra.mxu0 0
    %291 = vmatpush.bf16.msra.mxu0 0
    %292 = vmatpush.bf16.msra.mxu0 0
    %293 = vmatpush.bf16.msra.mxu0 0
    %294 = vmatpush.bf16.msra.mxu0 %v206
    %295 = vmatpush.bf16.msra.mxu0 %v196
    %296 = vmatpush.bf16.msra.mxu0 %v186
    %297 = vmatmul.bf16.gmra.mxu0 %v246
    %v298 = vpop.f32.mrf.mxu0
    %v299 = vadd.f32 0.0, %v298
    %v300 = vpop.f32.mrf.mxu0
    %v301 = vadd.f32 0.0, %v300
    %302 = vmatmul.bf16.gmra.mxu0 %v249
    %v303 = vpop.f32.mrf.mxu0
    %v304 = vadd.f32 0.0, %v303
    %v305 = vpop.f32.mrf.mxu0
    %v306 = vadd.f32 0.0, %v305
    %307 = vdwg.mxu0
    %308 = vmatpush.bf16.msra.mxu0 0
    %309 = vmatpush.bf16.msra.mxu0 0
    %310 = vmatpush.bf16.msra.mxu0 0
    %311 = vmatpush.bf16.msra.mxu0 0
    %312 = vmatpush.bf16.msra.mxu0 0
    %313 = vmatpush.bf16.msra.mxu0 %v207
    %314 = vmatpush.bf16.msra.mxu0 %v197
    %315 = vmatpush.bf16.msra.mxu0 %v187
    %316 = vmatmul.bf16.gmra.mxu0 %v246
    %v317 = vpop.f32.mrf.mxu0
    %v318 = vadd.f32 0.0, %v317
    %v319 = vpop.f32.mrf.mxu0
    %v320 = vadd.f32 0.0, %v319
    %321 = vmatmul.bf16.gmra.mxu0 %v249
    %v322 = vpop.f32.mrf.mxu0
    %v323 = vadd.f32 0.0, %v322
    %v324 = vpop.f32.mrf.mxu0
    %v325 = vadd.f32 0.0, %v324
    %326 = vdwg.mxu0
    %327 = vmatpush.bf16.msra.mxu0 0
    %328 = vmatpush.bf16.msra.mxu0 0
    %329 = vmatpush.bf16.msra.mxu0 0
    %330 = vmatpush.bf16.msra.mxu0 0
    %331 = vmatpush.bf16.msra.mxu0 0
    %332 = vmatpush.bf16.msra.mxu0 %v208
    %333 = vmatpush.bf16.msra.mxu0 %v198
    %334 = vmatpush.bf16.msra.mxu0 %v188
    %335 = vmatmul.bf16.gmra.mxu0 %v246
    %v336 = vpop.f32.mrf.mxu0
    %v337 = vadd.f32 0.0, %v336
    %v338 = vpop.f32.mrf.mxu0
    %v339 = vadd.f32 0.0, %v338
    %340 = vmatmul.bf16.gmra.mxu0 %v249
    %v341 = vpop.f32.mrf.mxu0
    %v342 = vadd.f32 0.0, %v341
    %v343 = vpop.f32.mrf.mxu0
    %v344 = vadd.f32 0.0, %v343
    %345 = vdwg.mxu0
    %346 = vmatpush.bf16.msra.mxu0 0
    %347 = vmatpush.bf16.msra.mxu0 0
    %348 = vmatpush.bf16.msra.mxu0 0
    %349 = vmatpush.bf16.msra.mxu0 0
    %350 = vmatpush.bf16.msra.mxu0 0
    %351 = vmatpush.bf16.msra.mxu0 %v209
    %352 = vmatpush.bf16.msra.mxu0 %v199
    %353 = vmatpush.bf16.msra.mxu0 %v189
    %354 = vmatmul.bf16.gmra.mxu0 %v246
    %v355 = vpop.f32.mrf.mxu0
    %v356 = vadd.f32 0.0, %v355
    %v357 = vpop.f32.mrf.mxu0
    %v358 = vadd.f32 0.0, %v357
    %359 = vmatmul.bf16.gmra.mxu0 %v249
    %v360 = vpop.f32.mrf.mxu0
    %v361 = vadd.f32 0.0, %v360
    %v362 = vpop.f32.mrf.mxu0
    %v363 = vadd.f32 0.0, %v362
    %364 = vdwg.mxu0
    %365 = vmatpush.bf16.msra.mxu0 0
    %366 = vmatpush.bf16.msra.mxu0 0
    %367 = vmatpush.bf16.msra.mxu0 0
    %368 = vmatpush.bf16.msra.mxu0 0
    %369 = vmatpush.bf16.msra.mxu0 0
    %370 = vmatpush.bf16.msra.mxu0 %v210
    %371 = vmatpush.bf16.msra.mxu0 %v200
    %372 = vmatpush.bf16.msra.mxu0 %v190
    %373 = vmatmul.bf16.gmra.mxu0 %v246
    %v374 = vpop.f32.mrf.mxu0
    %v375 = vadd.f32 0.0, %v374
    %v376 = vpop.f32.mrf.mxu0
    %v377 = vadd.f32 0.0, %v376
    %378 = vmatmul.bf16.gmra.mxu0 %v249
    %v379 = vpop.f32.mrf.mxu0
    %v380 = vadd.f32 0.0, %v379
    %v381 = vpop.f32.mrf.mxu0
    %v382 = vadd.f32 0.0, %v381
    %383 = vdwg.mxu0
    %384 = vmatpush.bf16.msra.mxu0 0
    %385 = vmatpush.bf16.msra.mxu0 0
    %386 = vmatpush.bf16.msra.mxu0 0
    %387 = vmatpush.bf16.msra.mxu0 0
    %388 = vmatpush.bf16.msra.mxu0 0
    %389 = vmatpush.bf16.msra.mxu0 %v211
    %390 = vmatpush.bf16.msra.mxu0 %v201
    %391 = vmatpush.bf16.msra.mxu0 %v191
    %392 = vmatmul.bf16.gmra.mxu0 %v246
    %v393 = vpop.f32.mrf.mxu0
    %v394 = vadd.f32 0.0, %v393
    %v395 = vpop.f32.mrf.mxu0
    %v396 = vadd.f32 0.0, %v395
    %397 = vmatmul.bf16.gmra.mxu0 %v249
    %v398 = vpop.f32.mrf.mxu0
    %v399 = vadd.f32 0.0, %v398
    %v400 = vpop.f32.mrf.mxu0
    %v401 = vadd.f32 0.0, %v400
    %402 = vdwg.mxu0
    %403 = vmatpush.bf16.msra.mxu0 0
    %404 = vmatpush.bf16.msra.mxu0 0
    %405 = vmatpush.bf16.msra.mxu0 0
    %406 = vmatpush.bf16.msra.mxu0 0
    %407 = vmatpush.bf16.msra.mxu0 0
    %408 = vmatpush.bf16.msra.mxu0 %v212
    %409 = vmatpush.bf16.msra.mxu0 %v202
    %410 = vmatpush.bf16.msra.mxu0 %v192
    %411 = vmatmul.bf16.gmra.mxu0 %v246
    %v412 = vpop.f32.mrf.mxu0
    %v413 = vadd.f32 0.0, %v412
    %v414 = vpop.f32.mrf.mxu0
    %v415 = vadd.f32 0.0, %v414
    %416 = vmatmul.bf16.gmra.mxu0 %v249
    %v417 = vpop.f32.mrf.mxu0
    %v418 = vadd.f32 0.0, %v417
    %v419 = vpop.f32.mrf.mxu0
    %v420 = vadd.f32 0.0, %v419
    %421 = vdwg.mxu0
    %422 = vmatpush.bf16.msra.mxu0 0
    %423 = vmatpush.bf16.msra.mxu0 0
    %424 = vmatpush.bf16.msra.mxu0 0
    %425 = vmatpush.bf16.msra.mxu0 0
    %426 = vmatpush.bf16.msra.mxu0 0
    %427 = vmatpush.bf16.msra.mxu0 %v213
    %428 = vmatpush.bf16.msra.mxu0 %v203
    %429 = vmatpush.bf16.msra.mxu0 %v193
    %430 = vmatmul.bf16.gmra.mxu0 %v246
    %v431 = vpop.f32.mrf.mxu0
    %v432 = vadd.f32 0.0, %v431
    %v433 = vpop.f32.mrf.mxu0
    %v434 = vadd.f32 0.0, %v433
    %435 = vmatmul.bf16.gmra.mxu0 %v249
    %v436 = vpop.f32.mrf.mxu0
    %v437 = vadd.f32 0.0, %v436
    %v438 = vpop.f32.mrf.mxu0
    %v439 = vadd.f32 0.0, %v438
    %440 = vdwg.mxu0
    %v441 = vld [vmem:[%s2] sm:$0xf]
    %v442 = vld [vmem:[%s2 + $0x4] sm:$0xf]
    %v443 = vld [vmem:[%s2 + $0x8] sm:$0xf]
    %v444 = vld [vmem:[%s2 + $0xc] sm:$0xf]
    %v445 = vld [vmem:[%s2 + $0x10] sm:$0xf]
    %v446 = vld [vmem:[%s2 + $0x14] sm:$0xf]
    %v447 = vld [vmem:[%s2 + $0x18] sm:$0xf]
    %v448 = vld [vmem:[%s2 + $0x1c] sm:$0xf]
    %v449 = vld [vmem:[%s2 + $0x20] sm:$0xf]
    %v450 = vld [vmem:[%s2 + $0x24] sm:$0xf]
    %v451 = vpack.c.bf16 %v263, %v261
    %v452 = vpack.c.bf16 %v282, %v280
    %v453 = vpack.c.bf16 %v301, %v299
    %v454 = vpack.c.bf16 %v320, %v318
    %v455 = vpack.c.bf16 %v339, %v337
    %v456 = vpack.c.bf16 %v358, %v356
    %v457 = vpack.c.bf16 %v377, %v375
    %v458 = vpack.c.bf16 %v396, %v394
    %v459 = vpack.c.bf16 %v415, %v413
    %v460 = vpack.c.bf16 %v434, %v432
    %v461 = vpack.c.bf16 %v268, %v266
    %v462 = vpack.c.bf16 %v287, %v285
    %v463 = vpack.c.bf16 %v306, %v304
    %v464 = vpack.c.bf16 %v325, %v323
    %v465 = vpack.c.bf16 %v344, %v342
    %v466 = vpack.c.bf16 %v363, %v361
    %v467 = vpack.c.bf16 %v382, %v380
    %v468 = vpack.c.bf16 %v401, %v399
    %v469 = vpack.c.bf16 %v420, %v418
    %v470 = vpack.c.bf16 %v439, %v437
    %v471 = vld [vmem:[#allocation4] sm:$0xff]
    %v472 = vld [vmem:[#allocation4 + $0x8] sm:$0xff]
    %v473 = vld [vmem:[#allocation4 + $0x10] sm:$0xff]
    %v474 = vld [vmem:[#allocation4 + $0x18] sm:$0xff]
    %v475 = vld [vmem:[#allocation4 + $0x20] sm:$0xff]
    %v476 = vld [vmem:[#allocation4 + $0x28] sm:$0xff]
    %v477 = vld [vmem:[#allocation4 + $0x30] sm:$0xff]
    %v478 = vld [vmem:[#allocation4 + $0x38] sm:$0xff]
    %v479 = vld [vmem:[#allocation4 + $0x40] sm:$0xff]
    %v480 = vld [vmem:[#allocation4 + $0x48] sm:$0xff]
    %v481 = vld [vmem:[#allocation4 + $0x50] sm:$0xff]
    %v482 = vld [vmem:[#allocation4 + $0x58] sm:$0xff]
    %v483 = vld [vmem:[#allocation4 + $0x60] sm:$0xff]
    %v484 = vld [vmem:[#allocation4 + $0x68] sm:$0xff]
    %v485 = vld [vmem:[#allocation4 + $0x70] sm:$0xff]
    %v486 = vld [vmem:[#allocation4 + $0x78] sm:$0xff]
    %v487 = vld [vmem:[#allocation4 + $0x80] sm:$0xff]
    %v488 = vld [vmem:[#allocation4 + $0x88] sm:$0xff]
    %v489 = vld [vmem:[#allocation4 + $0x90] sm:$0xff]
    %v490 = vld [vmem:[#allocation4 + $0x98] sm:$0xff]
    %v491 = vld [vmem:[#allocation4 + $0xa0] sm:$0xff]
    %v492 = vld [vmem:[#allocation4 + $0xa8] sm:$0xff]
    %v493 = vld [vmem:[#allocation4 + $0xb0] sm:$0xff]
    %v494 = vld [vmem:[#allocation4 + $0xb8] sm:$0xff]
    %v495 = vld [vmem:[#allocation4 + $0xc0] sm:$0xff]
    %v496 = vld [vmem:[#allocation4 + $0xc8] sm:$0xff]
    %v497 = vld [vmem:[#allocation4 + $0xd0] sm:$0xff]
    %v498 = vld [vmem:[#allocation4 + $0xd8] sm:$0xff]
    %v499 = vld [vmem:[#allocation4 + $0xe0] sm:$0xff]
    %v500 = vld [vmem:[#allocation4 + $0xe8] sm:$0xff]
    %v501 = vld [vmem:[#allocation4 + $0xf0] sm:$0xff]
    %v502 = vld [vmem:[#allocation4 + $0xf8] sm:$0xff]
    %v503 = vld [vmem:[#allocation4 + $0x100] sm:$0xff]
    %v504 = vld [vmem:[#allocation4 + $0x108] sm:$0xff]
    %v505 = vld [vmem:[#allocation4 + $0x110] sm:$0xff]
    %v506 = vld [vmem:[#allocation4 + $0x118] sm:$0xff]
    %v507 = vld [vmem:[#allocation4 + $0x120] sm:$0xff]
    %v508 = vld [vmem:[#allocation4 + $0x128] sm:$0xff]
    %v509 = vld [vmem:[#allocation4 + $0x130] sm:$0xff]
    %v510 = vld [vmem:[#allocation4 + $0x138] sm:$0xff]
    %v511 = vld [vmem:[#allocation4 + $0x140] sm:$0xff]
    %v512 = vld [vmem:[#allocation4 + $0x148] sm:$0xff]
    %v513 = vld [vmem:[#allocation4 + $0x150] sm:$0xff]
    %v514 = vld [vmem:[#allocation4 + $0x158] sm:$0xff]
    %v515 = vld [vmem:[#allocation4 + $0x160] sm:$0xff]
    %v516 = vld [vmem:[#allocation4 + $0x168] sm:$0xff]
    %v517 = vld [vmem:[#allocation4 + $0x170] sm:$0xff]
    %v518 = vld [vmem:[#allocation4 + $0x178] sm:$0xff]
    %v519 = vld [vmem:[#allocation4 + $0x180] sm:$0xff]
    %v520 = vld [vmem:[#allocation4 + $0x188] sm:$0xff]
    %v521 = vld [vmem:[#allocation4 + $0x190] sm:$0xff]
    %v522 = vld [vmem:[#allocation4 + $0x198] sm:$0xff]
    %v523 = vld [vmem:[#allocation4 + $0x1a0] sm:$0xff]
    %v524 = vld [vmem:[#allocation4 + $0x1a8] sm:$0xff]
    %v525 = vld [vmem:[#allocation4 + $0x1b0] sm:$0xff]
    %v526 = vld [vmem:[#allocation4 + $0x1b8] sm:$0xff]
    %v527 = vld [vmem:[#allocation4 + $0x1c0] sm:$0xff]
    %v528 = vld [vmem:[#allocation4 + $0x1c8] sm:$0xff]
    %v529 = vld [vmem:[#allocation4 + $0x1d0] sm:$0xff]
    %v530 = vld [vmem:[#allocation4 + $0x1d8] sm:$0xff]
    %v531 = vld [vmem:[#allocation4 + $0x1e0] sm:$0xff]
    %v532 = vld [vmem:[#allocation4 + $0x1e8] sm:$0xff]
    %v533 = vld [vmem:[#allocation4 + $0x1f0] sm:$0xff]
    %v534 = vld [vmem:[#allocation4 + $0x1f8] sm:$0xff]
    %v535 = vld [vmem:[#allocation4 + $0x200] sm:$0xff]
    %v536 = vld [vmem:[#allocation4 + $0x208] sm:$0xff]
    %v537 = vld [vmem:[#allocation4 + $0x210] sm:$0xff]
    %v538 = vld [vmem:[#allocation4 + $0x218] sm:$0xff]
    %v539 = vld [vmem:[#allocation4 + $0x220] sm:$0xff]
    %v540 = vld [vmem:[#allocation4 + $0x228] sm:$0xff]
    %v541 = vld [vmem:[#allocation4 + $0x230] sm:$0xff]
    %v542 = vld [vmem:[#allocation4 + $0x238] sm:$0xff]
    %v543 = vld [vmem:[#allocation4 + $0x240] sm:$0xff]
    %v544 = vld [vmem:[#allocation4 + $0x248] sm:$0xff]
    %v545 = vld [vmem:[#allocation4 + $0x250] sm:$0xff]
    %v546 = vld [vmem:[#allocation4 + $0x258] sm:$0xff]
    %v547 = vld [vmem:[#allocation4 + $0x260] sm:$0xff]
    %v548 = vld [vmem:[#allocation4 + $0x268] sm:$0xff]
    %v549 = vld [vmem:[#allocation4 + $0x270] sm:$0xff]
    %v550 = vld [vmem:[#allocation4 + $0x278] sm:$0xff]
    %v551 = vld [vmem:[#allocation4 + $0x280] sm:$0xff]
    %v552 = vld [vmem:[#allocation4 + $0x288] sm:$0xff]
    %v553 = vld [vmem:[#allocation4 + $0x290] sm:$0xff]
    %v554 = vld [vmem:[#allocation4 + $0x298] sm:$0xff]
    %v555 = vld [vmem:[#allocation4 + $0x2a0] sm:$0xff]
    %v556 = vld [vmem:[#allocation4 + $0x2a8] sm:$0xff]
    %v557 = vld [vmem:[#allocation4 + $0x2b0] sm:$0xff]
    %v558 = vld [vmem:[#allocation4 + $0x2b8] sm:$0xff]
    %v559 = vld [vmem:[#allocation4 + $0x2c0] sm:$0xff]
    %v560 = vld [vmem:[#allocation4 + $0x2c8] sm:$0xff]
    %v561 = vld [vmem:[#allocation4 + $0x2d0] sm:$0xff]
    %v562 = vld [vmem:[#allocation4 + $0x2d8] sm:$0xff]
    %v563 = vld [vmem:[#allocation4 + $0x2e0] sm:$0xff]
    %v564 = vld [vmem:[#allocation4 + $0x2e8] sm:$0xff]
    %v565 = vld [vmem:[#allocation4 + $0x2f0] sm:$0xff]
    %v566 = vld [vmem:[#allocation4 + $0x2f8] sm:$0xff]
    %v567 = vld [vmem:[#allocation4 + $0x300] sm:$0xff]
    %v568 = vld [vmem:[#allocation4 + $0x308] sm:$0xff]
    %v569 = vld [vmem:[#allocation4 + $0x310] sm:$0xff]
    %v570 = vld [vmem:[#allocation4 + $0x318] sm:$0xff]
    %v581 = vunpack.c.l.b16 %v441
    %v582 = vunpack.c.l.b16 %v442
    %v583 = vunpack.c.l.b16 %v443
    %v584 = vunpack.c.l.b16 %v444
    %v585 = vunpack.c.l.b16 %v445
    %v586 = vunpack.c.l.b16 %v446
    %v587 = vunpack.c.l.b16 %v447
    %v588 = vunpack.c.l.b16 %v448
    %v589 = vunpack.c.l.b16 %v449
    %v590 = vunpack.c.l.b16 %v450
    %v591 = vpack.c.b16 %v582, %v581
    %v592 = vpack.c.b16 %v584, %v583
    %v593 = vpack.c.b16 %v586, %v585
    %v594 = vpack.c.b16 %v588, %v587
    %v595 = vpack.c.b16 %v590, %v589
    %vm596 = vcmask 261120
    %v598 = vsel %vm596, %v591, 0
    %v601 = vsel %vm596, %v592, 0
    %v604 = vsel %vm596, %v593, 0
    %v607 = vsel %vm596, %v594, 0
    %v610 = vsel %vm596, %v595, 0
    %612 = vmatpush.bf16.msra.mxu0 0
    %613 = vmatpush.bf16.msra.mxu0 0
    %614 = vmatpush.bf16.msra.mxu0 0
    %615 = vmatpush.bf16.msra.mxu0 0
    %616 = vmatpush.bf16.msra.mxu0 0
    %617 = vmatpush.bf16.msra.mxu0 0
    %618 = vmatpush.bf16.msra.mxu0 %v461
    %619 = vmatpush.bf16.msra.mxu0 %v451
    %620 = vmatmul.bf16.gmra.mxu0 %v598
    %v621 = vpop.f32.mrf.mxu0
    %v622 = vadd.f32 %v471, %v621
    %v623 = vpop.f32.mrf.mxu0
    %v624 = vadd.f32 %v481, %v623
    %625 = vmatmul.bf16.gmra.mxu0 %v601
    %v626 = vpop.f32.mrf.mxu0
    %v627 = vadd.f32 %v491, %v626
    %v628 = vpop.f32.mrf.mxu0
    %v629 = vadd.f32 %v501, %v628
    %630 = vmatmul.bf16.gmra.mxu0 %v604
    %v631 = vpop.f32.mrf.mxu0
    %v632 = vadd.f32 %v511, %v631
    %v633 = vpop.f32.mrf.mxu0
    %v634 = vadd.f32 %v521, %v633
    %635 = vmatmul.bf16.gmra.mxu0 %v607
    %v636 = vpop.f32.mrf.mxu0
    %v637 = vadd.f32 %v531, %v636
    %v638 = vpop.f32.mrf.mxu0
    %v639 = vadd.f32 %v541, %v638
    %640 = vmatmul.bf16.gmra.mxu0 %v610
    %v641 = vpop.f32.mrf.mxu0
    %v642 = vadd.f32 %v551, %v641
    %v643 = vpop.f32.mrf.mxu0
    %v644 = vadd.f32 %v561, %v643
    %645 = vdwg.mxu0
    %646 = vmatpush.bf16.msra.mxu0 0
    %647 = vmatpush.bf16.msra.mxu0 0
    %648 = vmatpush.bf16.msra.mxu0 0
    %649 = vmatpush.bf16.msra.mxu0 0
    %650 = vmatpush.bf16.msra.mxu0 0
    %651 = vmatpush.bf16.msra.mxu0 0
    %652 = vmatpush.bf16.msra.mxu0 %v462
    %653 = vmatpush.bf16.msra.mxu0 %v452
    %654 = vmatmul.bf16.gmra.mxu0 %v598
    %v655 = vpop.f32.mrf.mxu0
    %v656 = vadd.f32 %v472, %v655
    %v657 = vpop.f32.mrf.mxu0
    %v658 = vadd.f32 %v482, %v657
    %659 = vmatmul.bf16.gmra.mxu0 %v601
    %v660 = vpop.f32.mrf.mxu0
    %v661 = vadd.f32 %v492, %v660
    %v662 = vpop.f32.mrf.mxu0
    %v663 = vadd.f32 %v502, %v662
    %664 = vmatmul.bf16.gmra.mxu0 %v604
    %v665 = vpop.f32.mrf.mxu0
    %v666 = vadd.f32 %v512, %v665
    %v667 = vpop.f32.mrf.mxu0
    %v668 = vadd.f32 %v522, %v667
    %669 = vmatmul.bf16.gmra.mxu0 %v607
    %v670 = vpop.f32.mrf.mxu0
    %v671 = vadd.f32 %v532, %v670
    %v672 = vpop.f32.mrf.mxu0
    %v673 = vadd.f32 %v542, %v672
    %674 = vmatmul.bf16.gmra.mxu0 %v610
    %v675 = vpop.f32.mrf.mxu0
    %v676 = vadd.f32 %v552, %v675
    %v677 = vpop.f32.mrf.mxu0
    %v678 = vadd.f32 %v562, %v677
    %679 = vdwg.mxu0
    %680 = vmatpush.bf16.msra.mxu0 0
    %681 = vmatpush.bf16.msra.mxu0 0
    %682 = vmatpush.bf16.msra.mxu0 0
    %683 = vmatpush.bf16.msra.mxu0 0
    %684 = vmatpush.bf16.msra.mxu0 0
    %685 = vmatpush.bf16.msra.mxu0 0
    %686 = vmatpush.bf16.msra.mxu0 %v463
    %687 = vmatpush.bf16.msra.mxu0 %v453
    %688 = vmatmul.bf16.gmra.mxu0 %v598
    %v689 = vpop.f32.mrf.mxu0
    %v690 = vadd.f32 %v473, %v689
    %v691 = vpop.f32.mrf.mxu0
    %v692 = vadd.f32 %v483, %v691
    %693 = vmatmul.bf16.gmra.mxu0 %v601
    %v694 = vpop.f32.mrf.mxu0
    %v695 = vadd.f32 %v493, %v694
    %v696 = vpop.f32.mrf.mxu0
    %v697 = vadd.f32 %v503, %v696
    %698 = vmatmul.bf16.gmra.mxu0 %v604
    %v699 = vpop.f32.mrf.mxu0
    %v700 = vadd.f32 %v513, %v699
    %v701 = vpop.f32.mrf.mxu0
    %v702 = vadd.f32 %v523, %v701
    %703 = vmatmul.bf16.gmra.mxu0 %v607
    %v704 = vpop.f32.mrf.mxu0
    %v705 = vadd.f32 %v533, %v704
    %v706 = vpop.f32.mrf.mxu0
    %v707 = vadd.f32 %v543, %v706
    %708 = vmatmul.bf16.gmra.mxu0 %v610
    %v709 = vpop.f32.mrf.mxu0
    %v710 = vadd.f32 %v553, %v709
    %v711 = vpop.f32.mrf.mxu0
    %v712 = vadd.f32 %v563, %v711
    %713 = vdwg.mxu0
    %714 = vmatpush.bf16.msra.mxu0 0
    %715 = vmatpush.bf16.msra.mxu0 0
    %716 = vmatpush.bf16.msra.mxu0 0
    %717 = vmatpush.bf16.msra.mxu0 0
    %718 = vmatpush.bf16.msra.mxu0 0
    %719 = vmatpush.bf16.msra.mxu0 0
    %720 = vmatpush.bf16.msra.mxu0 %v464
    %721 = vmatpush.bf16.msra.mxu0 %v454
    %722 = vmatmul.bf16.gmra.mxu0 %v598
    %v723 = vpop.f32.mrf.mxu0
    %v724 = vadd.f32 %v474, %v723
    %v725 = vpop.f32.mrf.mxu0
    %v726 = vadd.f32 %v484, %v725
    %727 = vmatmul.bf16.gmra.mxu0 %v601
    %v728 = vpop.f32.mrf.mxu0
    %v729 = vadd.f32 %v494, %v728
    %v730 = vpop.f32.mrf.mxu0
    %v731 = vadd.f32 %v504, %v730
    %732 = vmatmul.bf16.gmra.mxu0 %v604
    %v733 = vpop.f32.mrf.mxu0
    %v734 = vadd.f32 %v514, %v733
    %v735 = vpop.f32.mrf.mxu0
    %v736 = vadd.f32 %v524, %v735
    %737 = vmatmul.bf16.gmra.mxu0 %v607
    %v738 = vpop.f32.mrf.mxu0
    %v739 = vadd.f32 %v534, %v738
    %v740 = vpop.f32.mrf.mxu0
    %v741 = vadd.f32 %v544, %v740
    %742 = vmatmul.bf16.gmra.mxu0 %v610
    %v743 = vpop.f32.mrf.mxu0
    %v744 = vadd.f32 %v554, %v743
    %v745 = vpop.f32.mrf.mxu0
    %v746 = vadd.f32 %v564, %v745
    %747 = vdwg.mxu0
    %748 = vmatpush.bf16.msra.mxu0 0
    %749 = vmatpush.bf16.msra.mxu0 0
    %750 = vmatpush.bf16.msra.mxu0 0
    %751 = vmatpush.bf16.msra.mxu0 0
    %752 = vmatpush.bf16.msra.mxu0 0
    %753 = vmatpush.bf16.msra.mxu0 0
    %754 = vmatpush.bf16.msra.mxu0 %v465
    %755 = vmatpush.bf16.msra.mxu0 %v455
    %756 = vmatmul.bf16.gmra.mxu0 %v598
    %v757 = vpop.f32.mrf.mxu0
    %v758 = vadd.f32 %v475, %v757
    %v759 = vpop.f32.mrf.mxu0
    %v760 = vadd.f32 %v485, %v759
    %761 = vmatmul.bf16.gmra.mxu0 %v601
    %v762 = vpop.f32.mrf.mxu0
    %v763 = vadd.f32 %v495, %v762
    %v764 = vpop.f32.mrf.mxu0
    %v765 = vadd.f32 %v505, %v764
    %766 = vmatmul.bf16.gmra.mxu0 %v604
    %v767 = vpop.f32.mrf.mxu0
    %v768 = vadd.f32 %v515, %v767
    %v769 = vpop.f32.mrf.mxu0
    %v770 = vadd.f32 %v525, %v769
    %771 = vmatmul.bf16.gmra.mxu0 %v607
    %v772 = vpop.f32.mrf.mxu0
    %v773 = vadd.f32 %v535, %v772
    %v774 = vpop.f32.mrf.mxu0
    %v775 = vadd.f32 %v545, %v774
    %776 = vmatmul.bf16.gmra.mxu0 %v610
    %v777 = vpop.f32.mrf.mxu0
    %v778 = vadd.f32 %v555, %v777
    %v779 = vpop.f32.mrf.mxu0
    %v780 = vadd.f32 %v565, %v779
    %781 = vdwg.mxu0
    %782 = vmatpush.bf16.msra.mxu0 0
    %783 = vmatpush.bf16.msra.mxu0 0
    %784 = vmatpush.bf16.msra.mxu0 0
    %785 = vmatpush.bf16.msra.mxu0 0
    %786 = vmatpush.bf16.msra.mxu0 0
    %787 = vmatpush.bf16.msra.mxu0 0
    %788 = vmatpush.bf16.msra.mxu0 %v466
    %789 = vmatpush.bf16.msra.mxu0 %v456
    %790 = vmatmul.bf16.gmra.mxu0 %v598
    %v791 = vpop.f32.mrf.mxu0
    %v792 = vadd.f32 %v476, %v791
    %v793 = vpop.f32.mrf.mxu0
    %v794 = vadd.f32 %v486, %v793
    %795 = vmatmul.bf16.gmra.mxu0 %v601
    %v796 = vpop.f32.mrf.mxu0
    %v797 = vadd.f32 %v496, %v796
    %v798 = vpop.f32.mrf.mxu0
    %v799 = vadd.f32 %v506, %v798
    %800 = vmatmul.bf16.gmra.mxu0 %v604
    %v801 = vpop.f32.mrf.mxu0
    %v802 = vadd.f32 %v516, %v801
    %v803 = vpop.f32.mrf.mxu0
    %v804 = vadd.f32 %v526, %v803
    %805 = vmatmul.bf16.gmra.mxu0 %v607
    %v806 = vpop.f32.mrf.mxu0
    %v807 = vadd.f32 %v536, %v806
    %v808 = vpop.f32.mrf.mxu0
    %v809 = vadd.f32 %v546, %v808
    %810 = vmatmul.bf16.gmra.mxu0 %v610
    %v811 = vpop.f32.mrf.mxu0
    %v812 = vadd.f32 %v556, %v811
    %v813 = vpop.f32.mrf.mxu0
    %v814 = vadd.f32 %v566, %v813
    %815 = vdwg.mxu0
    %816 = vmatpush.bf16.msra.mxu0 0
    %817 = vmatpush.bf16.msra.mxu0 0
    %818 = vmatpush.bf16.msra.mxu0 0
    %819 = vmatpush.bf16.msra.mxu0 0
    %820 = vmatpush.bf16.msra.mxu0 0
    %821 = vmatpush.bf16.msra.mxu0 0
    %822 = vmatpush.bf16.msra.mxu0 %v467
    %823 = vmatpush.bf16.msra.mxu0 %v457
    %824 = vmatmul.bf16.gmra.mxu0 %v598
    %v825 = vpop.f32.mrf.mxu0
    %v826 = vadd.f32 %v477, %v825
    %v827 = vpop.f32.mrf.mxu0
    %v828 = vadd.f32 %v487, %v827
    %829 = vmatmul.bf16.gmra.mxu0 %v601
    %v830 = vpop.f32.mrf.mxu0
    %v831 = vadd.f32 %v497, %v830
    %v832 = vpop.f32.mrf.mxu0
    %v833 = vadd.f32 %v507, %v832
    %834 = vmatmul.bf16.gmra.mxu0 %v604
    %v835 = vpop.f32.mrf.mxu0
    %v836 = vadd.f32 %v517, %v835
    %v837 = vpop.f32.mrf.mxu0
    %v838 = vadd.f32 %v527, %v837
    %839 = vmatmul.bf16.gmra.mxu0 %v607
    %v840 = vpop.f32.mrf.mxu0
    %v841 = vadd.f32 %v537, %v840
    %v842 = vpop.f32.mrf.mxu0
    %v843 = vadd.f32 %v547, %v842
    %844 = vmatmul.bf16.gmra.mxu0 %v610
    %v845 = vpop.f32.mrf.mxu0
    %v846 = vadd.f32 %v557, %v845
    %v847 = vpop.f32.mrf.mxu0
    %v848 = vadd.f32 %v567, %v847
    %849 = vdwg.mxu0
    %850 = vmatpush.bf16.msra.mxu0 0
    %851 = vmatpush.bf16.msra.mxu0 0
    %852 = vmatpush.bf16.msra.mxu0 0
    %853 = vmatpush.bf16.msra.mxu0 0
    %854 = vmatpush.bf16.msra.mxu0 0
    %855 = vmatpush.bf16.msra.mxu0 0
    %856 = vmatpush.bf16.msra.mxu0 %v468
    %857 = vmatpush.bf16.msra.mxu0 %v458
    %858 = vmatmul.bf16.gmra.mxu0 %v598
    %v859 = vpop.f32.mrf.mxu0
    %v860 = vadd.f32 %v478, %v859
    %v861 = vpop.f32.mrf.mxu0
    %v862 = vadd.f32 %v488, %v861
    %863 = vmatmul.bf16.gmra.mxu0 %v601
    %v864 = vpop.f32.mrf.mxu0
    %v865 = vadd.f32 %v498, %v864
    %v866 = vpop.f32.mrf.mxu0
    %v867 = vadd.f32 %v508, %v866
    %868 = vmatmul.bf16.gmra.mxu0 %v604
    %v869 = vpop.f32.mrf.mxu0
    %v870 = vadd.f32 %v518, %v869
    %v871 = vpop.f32.mrf.mxu0
    %v872 = vadd.f32 %v528, %v871
    %873 = vmatmul.bf16.gmra.mxu0 %v607
    %v874 = vpop.f32.mrf.mxu0
    %v875 = vadd.f32 %v538, %v874
    %v876 = vpop.f32.mrf.mxu0
    %v877 = vadd.f32 %v548, %v876
    %878 = vmatmul.bf16.gmra.mxu0 %v610
    %v879 = vpop.f32.mrf.mxu0
    %v880 = vadd.f32 %v558, %v879
    %v881 = vpop.f32.mrf.mxu0
    %v882 = vadd.f32 %v568, %v881
    %883 = vdwg.mxu0
    %884 = vmatpush.bf16.msra.mxu0 0
    %885 = vmatpush.bf16.msra.mxu0 0
    %886 = vmatpush.bf16.msra.mxu0 0
    %887 = vmatpush.bf16.msra.mxu0 0
    %888 = vmatpush.bf16.msra.mxu0 0
    %889 = vmatpush.bf16.msra.mxu0 0
    %890 = vmatpush.bf16.msra.mxu0 %v469
    %891 = vmatpush.bf16.msra.mxu0 %v459
    %892 = vmatmul.bf16.gmra.mxu0 %v598
    %v893 = vpop.f32.mrf.mxu0
    %v894 = vadd.f32 %v479, %v893
    %v895 = vpop.f32.mrf.mxu0
    %v896 = vadd.f32 %v489, %v895
    %897 = vmatmul.bf16.gmra.mxu0 %v601
    %v898 = vpop.f32.mrf.mxu0
    %v899 = vadd.f32 %v499, %v898
    %v900 = vpop.f32.mrf.mxu0
    %v901 = vadd.f32 %v509, %v900
    %902 = vmatmul.bf16.gmra.mxu0 %v604
    %v903 = vpop.f32.mrf.mxu0
    %v904 = vadd.f32 %v519, %v903
    %v905 = vpop.f32.mrf.mxu0
    %v906 = vadd.f32 %v529, %v905
    %907 = vmatmul.bf16.gmra.mxu0 %v607
    %v908 = vpop.f32.mrf.mxu0
    %v909 = vadd.f32 %v539, %v908
    %v910 = vpop.f32.mrf.mxu0
    %v911 = vadd.f32 %v549, %v910
    %912 = vmatmul.bf16.gmra.mxu0 %v610
    %v913 = vpop.f32.mrf.mxu0
    %v914 = vadd.f32 %v559, %v913
    %v915 = vpop.f32.mrf.mxu0
    %v916 = vadd.f32 %v569, %v915
    %917 = vdwg.mxu0
    %918 = vmatpush.bf16.msra.mxu0 0
    %919 = vmatpush.bf16.msra.mxu0 0
    %920 = vmatpush.bf16.msra.mxu0 0
    %921 = vmatpush.bf16.msra.mxu0 0
    %922 = vmatpush.bf16.msra.mxu0 0
    %923 = vmatpush.bf16.msra.mxu0 0
    %924 = vmatpush.bf16.msra.mxu0 %v470
    %925 = vmatpush.bf16.msra.mxu0 %v460
    %926 = vmatmul.bf16.gmra.mxu0 %v598
    %v927 = vpop.f32.mrf.mxu0
    %v928 = vadd.f32 %v480, %v927
    %v929 = vpop.f32.mrf.mxu0
    %v930 = vadd.f32 %v490, %v929
    %931 = vmatmul.bf16.gmra.mxu0 %v601
    %v932 = vpop.f32.mrf.mxu0
    %v933 = vadd.f32 %v500, %v932
    %v934 = vpop.f32.mrf.mxu0
    %v935 = vadd.f32 %v510, %v934
    %936 = vmatmul.bf16.gmra.mxu0 %v604
    %v937 = vpop.f32.mrf.mxu0
    %v938 = vadd.f32 %v520, %v937
    %v939 = vpop.f32.mrf.mxu0
    %v940 = vadd.f32 %v530, %v939
    %941 = vmatmul.bf16.gmra.mxu0 %v607
    %v942 = vpop.f32.mrf.mxu0
    %v943 = vadd.f32 %v540, %v942
    %v944 = vpop.f32.mrf.mxu0
    %v945 = vadd.f32 %v550, %v944
    %946 = vmatmul.bf16.gmra.mxu0 %v610
    %v947 = vpop.f32.mrf.mxu0
    %v948 = vadd.f32 %v560, %v947
    %v949 = vpop.f32.mrf.mxu0
    %v950 = vadd.f32 %v570, %v949
    %951 = vdwg.mxu0
    %952 = vst [vmem:[%s4] sm:$0xff] %v622
    %953 = vst [vmem:[%s4 + $0x8] sm:$0xff] %v656
    %954 = vst [vmem:[%s4 + $0x10] sm:$0xff] %v690
    %955 = vst [vmem:[%s4 + $0x18] sm:$0xff] %v724
    %956 = vst [vmem:[%s4 + $0x20] sm:$0xff] %v758
    %957 = vst [vmem:[%s4 + $0x28] sm:$0xff] %v792
    %958 = vst [vmem:[%s4 + $0x30] sm:$0xff] %v826
    %959 = vst [vmem:[%s4 + $0x38] sm:$0xff] %v860
    %960 = vst [vmem:[%s4 + $0x40] sm:$0xff] %v894
    %961 = vst [vmem:[%s4 + $0x48] sm:$0xff] %v928
    %962 = vst [vmem:[%s4 + $0x50] sm:$0xff] %v624
    %963 = vst [vmem:[%s4 + $0x58] sm:$0xff] %v658
    %964 = vst [vmem:[%s4 + $0x60] sm:$0xff] %v692
    %965 = vst [vmem:[%s4 + $0x68] sm:$0xff] %v726
    %966 = vst [vmem:[%s4 + $0x70] sm:$0xff] %v760
    %967 = vst [vmem:[%s4 + $0x78] sm:$0xff] %v794
    %968 = vst [vmem:[%s4 + $0x80] sm:$0xff] %v828
    %969 = vst [vmem:[%s4 + $0x88] sm:$0xff] %v862
    %970 = vst [vmem:[%s4 + $0x90] sm:$0xff] %v896
    %971 = vst [vmem:[%s4 + $0x98] sm:$0xff] %v930
    %972 = vst [vmem:[%s4 + $0xa0] sm:$0xff] %v627
    %973 = vst [vmem:[%s4 + $0xa8] sm:$0xff] %v661
    %974 = vst [vmem:[%s4 + $0xb0] sm:$0xff] %v695
    %975 = vst [vmem:[%s4 + $0xb8] sm:$0xff] %v729
    %976 = vst [vmem:[%s4 + $0xc0] sm:$0xff] %v763
    %977 = vst [vmem:[%s4 + $0xc8] sm:$0xff] %v797
    %978 = vst [vmem:[%s4 + $0xd0] sm:$0xff] %v831
    %979 = vst [vmem:[%s4 + $0xd8] sm:$0xff] %v865
    %980 = vst [vmem:[%s4 + $0xe0] sm:$0xff] %v899
    %981 = vst [vmem:[%s4 + $0xe8] sm:$0xff] %v933
    %982 = vst [vmem:[%s4 + $0xf0] sm:$0xff] %v629
    %983 = vst [vmem:[%s4 + $0xf8] sm:$0xff] %v663
    %984 = vst [vmem:[%s4 + $0x100] sm:$0xff] %v697
    %985 = vst [vmem:[%s4 + $0x108] sm:$0xff] %v731
    %986 = vst [vmem:[%s4 + $0x110] sm:$0xff] %v765
    %987 = vst [vmem:[%s4 + $0x118] sm:$0xff] %v799
    %988 = vst [vmem:[%s4 + $0x120] sm:$0xff] %v833
    %989 = vst [vmem:[%s4 + $0x128] sm:$0xff] %v867
    %990 = vst [vmem:[%s4 + $0x130] sm:$0xff] %v901
    %991 = vst [vmem:[%s4 + $0x138] sm:$0xff] %v935
    %992 = vst [vmem:[%s4 + $0x140] sm:$0xff] %v632
    %993 = vst [vmem:[%s4 + $0x148] sm:$0xff] %v666
    %994 = vst [vmem:[%s4 + $0x150] sm:$0xff] %v700
    %995 = vst [vmem:[%s4 + $0x158] sm:$0xff] %v734
    %996 = vst [vmem:[%s4 + $0x160] sm:$0xff] %v768
    %997 = vst [vmem:[%s4 + $0x168] sm:$0xff] %v802
    %998 = vst [vmem:[%s4 + $0x170] sm:$0xff] %v836
    %999 = vst [vmem:[%s4 + $0x178] sm:$0xff] %v870
    %1000 = vst [vmem:[%s4 + $0x180] sm:$0xff] %v904
    %1001 = vst [vmem:[%s4 + $0x188] sm:$0xff] %v938
    %1002 = vst [vmem:[%s4 + $0x190] sm:$0xff] %v634
    %1003 = vst [vmem:[%s4 + $0x198] sm:$0xff] %v668
    %1004 = vst [vmem:[%s4 + $0x1a0] sm:$0xff] %v702
    %1005 = vst [vmem:[%s4 + $0x1a8] sm:$0xff] %v736
    %1006 = vst [vmem:[%s4 + $0x1b0] sm:$0xff] %v770
    %1007 = vst [vmem:[%s4 + $0x1b8] sm:$0xff] %v804
    %1008 = vst [vmem:[%s4 + $0x1c0] sm:$0xff] %v838
    %1009 = vst [vmem:[%s4 + $0x1c8] sm:$0xff] %v872
    %1010 = vst [vmem:[%s4 + $0x1d0] sm:$0xff] %v906
    %1011 = vst [vmem:[%s4 + $0x1d8] sm:$0xff] %v940
    %1012 = vst [vmem:[%s4 + $0x1e0] sm:$0xff] %v637
    %1013 = vst [vmem:[%s4 + $0x1e8] sm:$0xff] %v671
    %1014 = vst [vmem:[%s4 + $0x1f0] sm:$0xff] %v705
    %1015 = vst [vmem:[%s4 + $0x1f8] sm:$0xff] %v739
    %1016 = vst [vmem:[%s4 + $0x200] sm:$0xff] %v773
    %1017 = vst [vmem:[%s4 + $0x208] sm:$0xff] %v807
    %1018 = vst [vmem:[%s4 + $0x210] sm:$0xff] %v841
    %1019 = vst [vmem:[%s4 + $0x218] sm:$0xff] %v875
    %1020 = vst [vmem:[%s4 + $0x220] sm:$0xff] %v909
    %1021 = vst [vmem:[%s4 + $0x228] sm:$0xff] %v943
    %1022 = vst [vmem:[%s4 + $0x230] sm:$0xff] %v639
    %1023 = vst [vmem:[%s4 + $0x238] sm:$0xff] %v673
    %1024 = vst [vmem:[%s4 + $0x240] sm:$0xff] %v707
    %1025 = vst [vmem:[%s4 + $0x248] sm:$0xff] %v741
    %1026 = vst [vmem:[%s4 + $0x250] sm:$0xff] %v775
    %1027 = vst [vmem:[%s4 + $0x258] sm:$0xff] %v809
    %1028 = vst [vmem:[%s4 + $0x260] sm:$0xff] %v843
    %1029 = vst [vmem:[%s4 + $0x268] sm:$0xff] %v877
    %1030 = vst [vmem:[%s4 + $0x270] sm:$0xff] %v911
    %1031 = vst [vmem:[%s4 + $0x278] sm:$0xff] %v945
    %1032 = vst [vmem:[%s4 + $0x280] sm:$0xff] %v642
    %1033 = vst [vmem:[%s4 + $0x288] sm:$0xff] %v676
    %1034 = vst [vmem:[%s4 + $0x290] sm:$0xff] %v710
    %1035 = vst [vmem:[%s4 + $0x298] sm:$0xff] %v744
    %1036 = vst [vmem:[%s4 + $0x2a0] sm:$0xff] %v778
    %1037 = vst [vmem:[%s4 + $0x2a8] sm:$0xff] %v812
    %1038 = vst [vmem:[%s4 + $0x2b0] sm:$0xff] %v846
    %1039 = vst [vmem:[%s4 + $0x2b8] sm:$0xff] %v880
    %1040 = vst [vmem:[%s4 + $0x2c0] sm:$0xff] %v914
    %1041 = vst [vmem:[%s4 + $0x2c8] sm:$0xff] %v948
    %1042 = vst [vmem:[%s4 + $0x2d0] sm:$0xff] %v644
    %1043 = vst [vmem:[%s4 + $0x2d8] sm:$0xff] %v678
    %1044 = vst [vmem:[%s4 + $0x2e0] sm:$0xff] %v712
    %1045 = vst [vmem:[%s4 + $0x2e8] sm:$0xff] %v746
    %1046 = vst [vmem:[%s4 + $0x2f0] sm:$0xff] %v780
    %1047 = vst [vmem:[%s4 + $0x2f8] sm:$0xff] %v814
    %1048 = vst [vmem:[%s4 + $0x300] sm:$0xff] %v848
    %1049 = vst [vmem:[%s4 + $0x308] sm:$0xff] %v882
    %1050 = vst [vmem:[%s4 + $0x310] sm:$0xff] %v916
    %1051 = vst [vmem:[%s4 + $0x318] sm:$0xff] %v950
    // Predicated region
    $region26: #{model_forward.1} parent=1 // pred_check
      _
    $region27: #{model_forward.1} parent=1 // pred_check_branch
      %1053 = sbr.rel (0) target = $region29
    $region28: #{model_forward.1} parent=1 // pred_region
      _
    $region29: #{model_forward.1} parent=1 // pred_fallthru
      _
    // Predicated region
    $region30: #{model_forward.1} parent=1 // pred_check
      _
    $region31: #{model_forward.1} parent=1 // pred_check_branch
      %1055 = sbr.rel (0) target = $region33
    $region32: #{model_forward.1} parent=1 // pred_region
      _
    $region33: #{model_forward.1} parent=1 // pred_fallthru
      _
    %1056 = vsyncpa [#allocation3], 1
    %1057 = vsyncpa [#allocation5], 1

</llo_original>
